<compile_context>
chip_gen: v7x
topology: tpu7x:2x2x1
jax: 0.10.0
libtpu: 0.0.40
codegen_flags: <defaults>
</compile_context>

<pallas_src>
import math
from functools import partial

import jax
import jax.numpy as jnp
from jax.experimental import pallas as pl
from jax.experimental.pallas import tpu as pltpu


def sublayer_connection_kernel(x_ref, w_ref, b_ref, gamma_ref, beta_ref, o_ref,
                               *, eps: float, d: int):
    x = x_ref[...]                                            # (TR, D) f32

    # sublayer(x): Linear(dim, dim) -- MXU matmul, bf16 operands, f32 accumulate.
    y = jnp.dot(x.astype(w_ref.dtype), w_ref[...],
                preferred_element_type=jnp.float32)
    y = y + b_ref[...].astype(jnp.float32)                    # (TR, D) f32

    # LayerNorm with torch semantics (unbiased std, eps added to std).
    # Single pass over the lane axis: sum and sum-of-squares together.
    s1 = jnp.sum(y, axis=-1, keepdims=True)                   # (TR, 1)
    s2 = jnp.sum(y * y, axis=-1, keepdims=True)               # (TR, 1)
    mean = s1 * (1.0 / d)
    var = jnp.maximum(s2 - s1 * mean, 0.0) * (1.0 / (d - 1))  # unbiased (ddof=1)
    inv = pl.reciprocal(jnp.sqrt(var) + eps, approx=False)    # (TR, 1) -> EUP

    normed = gamma_ref[...] * (y - mean) * inv + beta_ref[...]

    # Dropout is identity in inference.
    # TODO(synk): training-mode dropout (PRNG mask) not implemented.
    o_ref[...] = (x + normed).astype(o_ref.dtype)


def _make_call(R, D, row_tile, out_dtype, eps, *, single_buffer_consts,
               vmem_limit_bytes, cost_estimate):
    const_kwargs = {}
    if single_buffer_consts:
        const_kwargs = dict(pipeline_mode=pl.Buffered(1))

    kernel = partial(sublayer_connection_kernel, eps=eps, d=D)
    return pl.pallas_call(
        kernel,
        out_shape=jax.ShapeDtypeStruct((R, D), out_dtype),
        grid_spec=pltpu.PrefetchScalarGridSpec(
            num_scalar_prefetch=0,
            grid=(R // row_tile,),
            in_specs=[
                pl.BlockSpec((row_tile, D), lambda i: (i, 0)),           # x rows
                pl.BlockSpec((D, D), lambda i: (0, 0), **const_kwargs),  # W (bf16)
                pl.BlockSpec((1, D), lambda i: (0, 0), **const_kwargs),  # bias
                pl.BlockSpec((1, D), lambda i: (0, 0), **const_kwargs),  # a_2
                pl.BlockSpec((1, D), lambda i: (0, 0), **const_kwargs),  # b_2
            ],
            out_specs=pl.BlockSpec((row_tile, D), lambda i: (i, 0)),
        ),
        compiler_params=pltpu.CompilerParams(
            dimension_semantics=("parallel",),
            vmem_limit_bytes=vmem_limit_bytes,
        ),
        cost_estimate=cost_estimate,
    )


def sublayer_connection(x, w, b, gamma, beta, *, eps=1e-6, row_tile=256,
                        matmul_dtype=jnp.bfloat16):
    """x: [B, S, D] float32. Returns [B, S, D] in x.dtype."""
    B, S, D = x.shape
    assert D > 1, "unbiased std (torch.std) needs D > 1"
    R = B * S
    x2 = x.reshape(R, D)

    # Largest row tile <= row_tile that divides R and keeps the block TPU-tileable
    # (multiple of 8 sublanes, or the full row extent).
    rt = min(row_tile, R)
    if R % rt != 0:
        rt = math.gcd(R, rt)
    if rt != R and rt % 8 != 0:
        rt = R

    w_in = w.astype(matmul_dtype)
    w_itemsize = w_in.dtype.itemsize

    # Scoped VMEM: double-buffered row tiles (in + out), weight (counted
    # conservatively as double-buffered), params, plus slack.
    vmem_bytes = (2 * rt * D * 4) * 2 + 2 * D * D * w_itemsize + 8 * D * 4 + (2 << 20)
    vmem_bytes = int(min(max(vmem_bytes, 32 * 1024 * 1024), 100 * 1024 * 1024))

    cost = pl.CostEstimate(
        flops=2 * R * D * D + 12 * R * D,
        transcendentals=2 * R,                       # sqrt + reciprocal per row
        bytes_accessed=2 * R * D * 4 + D * D * w_itemsize + 3 * D * 4,
    )

    args = (x2, w_in, b, gamma, beta)
    try:
        out = _make_call(R, D, rt, x.dtype, eps, single_buffer_consts=True,
                         vmem_limit_bytes=vmem_bytes, cost_estimate=cost)(*args)
    except Exception:
        # Fallback if this jax build rejects pl.Buffered(1) on pallas_call specs.
        out = _make_call(R, D, rt, x.dtype, eps, single_buffer_consts=False,
                         vmem_limit_bytes=vmem_bytes, cost_estimate=cost)(*args)
    return out.reshape(B, S, D)


def reference(x, w, b, gamma, beta, eps=1e-6, matmul_dtype=jnp.float32):
    y = jnp.einsum("bsd,de->bse", x.astype(matmul_dtype), w.astype(matmul_dtype),
                   preferred_element_type=jnp.float32) + b[0]
    mean = jnp.mean(y, axis=-1, keepdims=True)
    c = y - mean
    std = jnp.sqrt(jnp.sum(c * c, axis=-1, keepdims=True) / (y.shape[-1] - 1))
    return x + (gamma[0] * c / (std + eps) + beta[0])


if __name__ == "__main__":
    B, S, D = 2, 8, 32
    key = jax.random.PRNGKey(0)
    kx, kw, kb = jax.random.split(key, 3)

    x = jax.random.normal(kx, (B, S, D), dtype=jnp.float32)
    # Deterministic "sublayer" parameters (Linear(dim, dim))
    w = jax.random.normal(kw, (D, D), dtype=jnp.float32) / jnp.sqrt(D)
    b = jax.random.normal(kb, (1, D), dtype=jnp.float32) * 0.01
    # LayerNorm parameters as in __init__: a_2 = ones, b_2 = zeros
    gamma = jnp.ones((1, D), dtype=jnp.float32)
    beta = jnp.zeros((1, D), dtype=jnp.float32)

    out = sublayer_connection(x, w, b, gamma, beta)
    out = jax.block_until_ready(out)

    # Tight check against a reference that uses the same bf16-operand matmul,
    # and a looser check against the pure-f32 (torch-semantics) reference.
    ref_bf16 = reference(x, w, b, gamma, beta, matmul_dtype=jnp.bfloat16)
    ref_f32 = reference(x, w, b, gamma, beta, matmul_dtype=jnp.float32)

    assert out.shape == (B, S, D)
    assert jnp.allclose(out, ref_bf16, atol=1e-3, rtol=1e-3)
    assert jnp.allclose(out, ref_f32, atol=5e-2, rtol=5e-2)
    print("KERNEL_OK")
</pallas_src>

<mosaic_0001>
module attributes {stable_mosaic.version = 11 : i64} {
  func.func @sublayer_connection_kernel(%arg0: i32, %arg1: memref<16x32xf32, #tpu.memory_space<vmem>>, %arg2: memref<32x32xbf16, #tpu.memory_space<vmem>>, %arg3: memref<1x32xf32, #tpu.memory_space<vmem>>, %arg4: memref<1x32xf32, #tpu.memory_space<vmem>>, %arg5: memref<1x32xf32, #tpu.memory_space<vmem>>, %arg6: memref<16x32xf32, #tpu.memory_space<vmem>>) attributes {dimension_semantics = [#tpu.dimension_semantics<parallel>], iteration_bounds = array<i64: 1>, scalar_prefetch = 0 : i64, scratch_operands = 0 : i64, tpu.core_type = #tpu.core_type<tc>, window_params = [{transform_indices = @transform_0, window_bounds = array<i64: 16, 32>}, {pipeline_mode = #tpu.pipeline_mode<synchronous>, transform_indices = @transform_1, window_bounds = array<i64: 32, 32>}, {pipeline_mode = #tpu.pipeline_mode<synchronous>, transform_indices = @transform_2, window_bounds = array<i64: 1, 32>}, {pipeline_mode = #tpu.pipeline_mode<synchronous>, transform_indices = @transform_3, window_bounds = array<i64: 1, 32>}, {pipeline_mode = #tpu.pipeline_mode<synchronous>, transform_indices = @transform_4, window_bounds = array<i64: 1, 32>}, {transform_indices = @transform_5, window_bounds = array<i64: 16, 32>}]} {
    %c0 = arith.constant 0 : index
    %c0_0 = arith.constant 0 : index
    %0 = vector.load %arg1[%c0, %c0_0] : memref<16x32xf32, #tpu.memory_space<vmem>>, vector<16x32xf32>
    %1 = arith.truncf %0 : vector<16x32xf32> to vector<16x32xbf16>
    %c0_1 = arith.constant 0 : index
    %c0_2 = arith.constant 0 : index
    %2 = vector.load %arg2[%c0_1, %c0_2] : memref<32x32xbf16, #tpu.memory_space<vmem>>, vector<32x32xbf16>
    %cst = arith.constant dense<0.000000e+00> : vector<16x32xf32>
    %3 = tpu.matmul %1, %2, %cst {dimension_numbers = #tpu.dot_dimension_numbers<[1], [0], [0], [1], [0, 0, 1, 1], [], []>} : vector<16x32xbf16>, vector<32x32xbf16>, vector<16x32xf32> -> vector<16x32xf32>
    %c0_3 = arith.constant 0 : index
    %c0_4 = arith.constant 0 : index
    %4 = vector.load %arg3[%c0_3, %c0_4] : memref<1x32xf32, #tpu.memory_space<vmem>>, vector<1x32xf32>
    %5 = vector.broadcast %4 : vector<1x32xf32> to vector<16x32xf32>
    %6 = arith.addf %3, %5 : vector<16x32xf32>
    %cst_5 = arith.constant dense<0.000000e+00> : vector<16xf32>
    %7 = vector.multi_reduction <add>, %6, %cst_5 [1] : vector<16x32xf32> to vector<16xf32>
    %8 = vector.shape_cast %7 : vector<16xf32> to vector<16x1xf32>
    %9 = arith.mulf %6, %6 : vector<16x32xf32>
    %cst_6 = arith.constant dense<0.000000e+00> : vector<16xf32>
    %10 = vector.multi_reduction <add>, %9, %cst_6 [1] : vector<16x32xf32> to vector<16xf32>
    %11 = vector.shape_cast %10 : vector<16xf32> to vector<16x1xf32>
    %cst_7 = arith.constant 3.125000e-02 : f32
    %12 = vector.broadcast %cst_7 : f32 to vector<16x1xf32>
    %13 = arith.mulf %8, %12 : vector<16x1xf32>
    %14 = arith.mulf %8, %13 : vector<16x1xf32>
    %15 = arith.subf %11, %14 : vector<16x1xf32>
    %cst_8 = arith.constant 0.000000e+00 : f32
    %16 = vector.broadcast %cst_8 : f32 to vector<16x1xf32>
    %17 = arith.maximumf %15, %16 : vector<16x1xf32>
    %cst_9 = arith.constant 0.0322580636 : f32
    %18 = vector.broadcast %cst_9 : f32 to vector<16x1xf32>
    %19 = arith.mulf %17, %18 : vector<16x1xf32>
    %20 = math.sqrt %19 : vector<16x1xf32>
    %cst_10 = arith.constant 9.99999997E-7 : f32
    %21 = vector.broadcast %cst_10 : f32 to vector<16x1xf32>
    %22 = arith.addf %20, %21 : vector<16x1xf32>
    %23 = tpu.reciprocal %22 : vector<16x1xf32> -> vector<16x1xf32>
    %c0_11 = arith.constant 0 : index
    %c0_12 = arith.constant 0 : index
    %24 = vector.load %arg4[%c0_11, %c0_12] : memref<1x32xf32, #tpu.memory_space<vmem>>, vector<1x32xf32>
    %25 = vector.broadcast %13 : vector<16x1xf32> to vector<16x32xf32>
    %26 = arith.subf %6, %25 : vector<16x32xf32>
    %27 = vector.broadcast %24 : vector<1x32xf32> to vector<16x32xf32>
    %28 = arith.mulf %27, %26 : vector<16x32xf32>
    %29 = vector.broadcast %23 : vector<16x1xf32> to vector<16x32xf32>
    %30 = arith.mulf %28, %29 : vector<16x32xf32>
    %c0_13 = arith.constant 0 : index
    %c0_14 = arith.constant 0 : index
    %31 = vector.load %arg5[%c0_13, %c0_14] : memref<1x32xf32, #tpu.memory_space<vmem>>, vector<1x32xf32>
    %32 = vector.broadcast %31 : vector<1x32xf32> to vector<16x32xf32>
    %33 = arith.addf %30, %32 : vector<16x32xf32>
    %34 = arith.addf %0, %33 : vector<16x32xf32>
    %c0_15 = arith.constant 0 : index
    %c0_16 = arith.constant 0 : index
    %35 = vector.load %arg6[%c0_15, %c0_16] : memref<16x32xf32, #tpu.memory_space<vmem>>, vector<16x32xf32>
    tpu.vector_store %arg6[%c0_15, %c0_16], %34 {strides = array<i32>} : memref<16x32xf32, #tpu.memory_space<vmem>>, vector<16x32xf32>,
    return
  }
  func.func @transform_0(%arg0: i32) -> (i32, i32) {
    %c0_i32 = arith.constant 0 : i32
    %c0_i32_0 = arith.constant 0 : i32
    return %arg0, %c0_i32 : i32, i32
  }
  func.func @transform_1(%arg0: i32) -> (i32, i32) {
    %c0_i32 = arith.constant 0 : i32
    %c0_i32_0 = arith.constant 0 : i32
    %c0_i32_1 = arith.constant 0 : i32
    return %c0_i32, %c0_i32_0 : i32, i32
  }
  func.func @transform_2(%arg0: i32) -> (i32, i32) {
    %c0_i32 = arith.constant 0 : i32
    %c0_i32_0 = arith.constant 0 : i32
    %c0_i32_1 = arith.constant 0 : i32
    return %c0_i32, %c0_i32_0 : i32, i32
  }
  func.func @transform_3(%arg0: i32) -> (i32, i32) {
    %c0_i32 = arith.constant 0 : i32
    %c0_i32_0 = arith.constant 0 : i32
    %c0_i32_1 = arith.constant 0 : i32
    return %c0_i32, %c0_i32_0 : i32, i32
  }
  func.func @transform_4(%arg0: i32) -> (i32, i32) {
    %c0_i32 = arith.constant 0 : i32
    %c0_i32_0 = arith.constant 0 : i32
    %c0_i32_1 = arith.constant 0 : i32
    return %c0_i32, %c0_i32_0 : i32, i32
  }
  func.func @transform_5(%arg0: i32) -> (i32, i32) {
    %c0_i32 = arith.constant 0 : i32
    %c0_i32_0 = arith.constant 0 : i32
    return %arg0, %c0_i32 : i32, i32
  }
}

module attributes {stable_mosaic.version = 11 : i64} {
  func.func @sublayer_connection_kernel(%arg0: i32, %arg1: memref<16x32xf32, #tpu.memory_space<vmem>>, %arg2: memref<32x32xbf16, #tpu.memory_space<vmem>>, %arg3: memref<1x32xf32, #tpu.memory_space<vmem>>, %arg4: memref<1x32xf32, #tpu.memory_space<vmem>>, %arg5: memref<1x32xf32, #tpu.memory_space<vmem>>, %arg6: memref<16x32xf32, #tpu.memory_space<vmem>>) attributes {dimension_semantics = [#tpu.dimension_semantics<parallel>], iteration_bounds = array<i64: 1>, scalar_prefetch = 0 : i64, scratch_operands = 0 : i64, tpu.core_type = #tpu.core_type<tc>, window_params = [{transform_indices = @transform_0, window_bounds = array<i64: 16, 32>}, {pipeline_mode = #tpu.pipeline_mode<synchronous>, transform_indices = @transform_1, window_bounds = array<i64: 32, 32>}, {pipeline_mode = #tpu.pipeline_mode<synchronous>, transform_indices = @transform_2, window_bounds = array<i64: 1, 32>}, {pipeline_mode = #tpu.pipeline_mode<synchronous>, transform_indices = @transform_3, window_bounds = array<i64: 1, 32>}, {pipeline_mode = #tpu.pipeline_mode<synchronous>, transform_indices = @transform_4, window_bounds = array<i64: 1, 32>}, {transform_indices = @transform_5, window_bounds = array<i64: 16, 32>}]} {
    %c0 = arith.constant 0 : index
    %c0_0 = arith.constant 0 : index
    %0 = vector.load %arg1[%c0, %c0_0] : memref<16x32xf32, #tpu.memory_space<vmem>>, vector<16x32xf32>
    %1 = arith.truncf %0 : vector<16x32xf32> to vector<16x32xbf16>
    %c0_1 = arith.constant 0 : index
    %c0_2 = arith.constant 0 : index
    %2 = vector.load %arg2[%c0_1, %c0_2] : memref<32x32xbf16, #tpu.memory_space<vmem>>, vector<32x32xbf16>
    %cst = arith.constant dense<0.000000e+00> : vector<16x32xf32>
    %3 = tpu.matmul %1, %2, %cst {dimension_numbers = #tpu.dot_dimension_numbers<[1], [0], [0], [1], [0, 0, 1, 1], [], []>} : vector<16x32xbf16>, vector<32x32xbf16>, vector<16x32xf32> -> vector<16x32xf32>
    %c0_3 = arith.constant 0 : index
    %c0_4 = arith.constant 0 : index
    %4 = vector.load %arg3[%c0_3, %c0_4] : memref<1x32xf32, #tpu.memory_space<vmem>>, vector<1x32xf32>
    %5 = vector.broadcast %4 : vector<1x32xf32> to vector<16x32xf32>
    %6 = arith.addf %3, %5 : vector<16x32xf32>
    %cst_5 = arith.constant dense<0.000000e+00> : vector<16xf32>
    %7 = vector.multi_reduction <add>, %6, %cst_5 [1] : vector<16x32xf32> to vector<16xf32>
    %8 = vector.shape_cast %7 : vector<16xf32> to vector<16x1xf32>
    %9 = arith.mulf %6, %6 : vector<16x32xf32>
    %cst_6 = arith.constant dense<0.000000e+00> : vector<16xf32>
    %10 = vector.multi_reduction <add>, %9, %cst_6 [1] : vector<16x32xf32> to vector<16xf32>
    %11 = vector.shape_cast %10 : vector<16xf32> to vector<16x1xf32>
    %cst_7 = arith.constant 3.125000e-02 : f32
    %12 = vector.broadcast %cst_7 : f32 to vector<16x1xf32>
    %13 = arith.mulf %8, %12 : vector<16x1xf32>
    %14 = arith.mulf %8, %13 : vector<16x1xf32>
    %15 = arith.subf %11, %14 : vector<16x1xf32>
    %cst_8 = arith.constant 0.000000e+00 : f32
    %16 = vector.broadcast %cst_8 : f32 to vector<16x1xf32>
    %17 = arith.maximumf %15, %16 : vector<16x1xf32>
    %cst_9 = arith.constant 0.0322580636 : f32
    %18 = vector.broadcast %cst_9 : f32 to vector<16x1xf32>
    %19 = arith.mulf %17, %18 : vector<16x1xf32>
    %20 = math.sqrt %19 : vector<16x1xf32>
    %cst_10 = arith.constant 9.99999997E-7 : f32
    %21 = vector.broadcast %cst_10 : f32 to vector<16x1xf32>
    %22 = arith.addf %20, %21 : vector<16x1xf32>
    %23 = tpu.reciprocal %22 : vector<16x1xf32> -> vector<16x1xf32>
    %c0_11 = arith.constant 0 : index
    %c0_12 = arith.constant 0 : index
    %24 = vector.load %arg4[%c0_11, %c0_12] : memref<1x32xf32, #tpu.memory_space<vmem>>, vector<1x32xf32>
    %25 = vector.broadcast %13 : vector<16x1xf32> to vector<16x32xf32>
    %26 = arith.subf %6, %25 : vector<16x32xf32>
    %27 = vector.broadcast %24 : vector<1x32xf32> to vector<16x32xf32>
    %28 = arith.mulf %27, %26 : vector<16x32xf32>
    %29 = vector.broadcast %23 : vector<16x1xf32> to vector<16x32xf32>
    %30 = arith.mulf %28, %29 : vector<16x32xf32>
    %c0_13 = arith.constant 0 : index
    %c0_14 = arith.constant 0 : index
    %31 = vector.load %arg5[%c0_13, %c0_14] : memref<1x32xf32, #tpu.memory_space<vmem>>, vector<1x32xf32>
    %32 = vector.broadcast %31 : vector<1x32xf32> to vector<16x32xf32>
    %33 = arith.addf %30, %32 : vector<16x32xf32>
    %34 = arith.addf %0, %33 : vector<16x32xf32>
    %c0_15 = arith.constant 0 : index
    %c0_16 = arith.constant 0 : index
    %35 = vector.load %arg6[%c0_15, %c0_16] : memref<16x32xf32, #tpu.memory_space<vmem>>, vector<16x32xf32>
    tpu.vector_store %arg6[%c0_15, %c0_16], %34 {strides = array<i32>} : memref<16x32xf32, #tpu.memory_space<vmem>>, vector<16x32xf32>,
    return
  }
  func.func @transform_0(%arg0: i32) -> (i32, i32) {
    %c0_i32 = arith.constant 0 : i32
    %c0_i32_0 = arith.constant 0 : i32
    return %arg0, %c0_i32 : i32, i32
  }
  func.func @transform_1(%arg0: i32) -> (i32, i32) {
    %c0_i32 = arith.constant 0 : i32
    %c0_i32_0 = arith.constant 0 : i32
    %c0_i32_1 = arith.constant 0 : i32
    return %c0_i32, %c0_i32_0 : i32, i32
  }
  func.func @transform_2(%arg0: i32) -> (i32, i32) {
    %c0_i32 = arith.constant 0 : i32
    %c0_i32_0 = arith.constant 0 : i32
    %c0_i32_1 = arith.constant 0 : i32
    return %c0_i32, %c0_i32_0 : i32, i32
  }
  func.func @transform_3(%arg0: i32) -> (i32, i32) {
    %c0_i32 = arith.constant 0 : i32
    %c0_i32_0 = arith.constant 0 : i32
    %c0_i32_1 = arith.constant 0 : i32
    return %c0_i32, %c0_i32_0 : i32, i32
  }
  func.func @transform_4(%arg0: i32) -> (i32, i32) {
    %c0_i32 = arith.constant 0 : i32
    %c0_i32_0 = arith.constant 0 : i32
    %c0_i32_1 = arith.constant 0 : i32
    return %c0_i32, %c0_i32_0 : i32, i32
  }
  func.func @transform_5(%arg0: i32) -> (i32, i32) {
    %c0_i32 = arith.constant 0 : i32
    %c0_i32_0 = arith.constant 0 : i32
    return %arg0, %c0_i32 : i32, i32
  }
}

</mosaic_0001>

<llo_original>
// kernel: tpu_custom_call.1
$region0: #{tpu_custom_call.1}
  #allocation0 [shape = 'u32[]', space=smem, size = 0x4, offset = 0x4, fixed_abs, tag = 'smem constant byte address 0x4 - core index']
  #allocation1 [shape = 'u32[144,128]{1,0:T(1,128)}', space=vmem, size = 0x12000, scoped, tag = 'internal scratch']
  %s0 = inlined_call_operand.hbm [shape: f32[16,32], index: 0, kind: input, shape index: {}]
  %s1 = inlined_call_operand.hbm [shape: bf16[32,32], index: 1, kind: input, shape index: {}]
  %s2 = inlined_call_operand.vmem [shape: f32[1,32], index: 2, kind: input, shape index: {}]
  %s3 = inlined_call_operand.vmem [shape: f32[1,32], index: 3, kind: input, shape index: {}]
  %s4 = inlined_call_operand.vmem [shape: f32[1,32], index: 4, kind: input, shape index: {}]
  %s5 = inlined_call_operand.hbm [shape: f32[16,32], index: 5, kind: output, shape index: {}]
  %s6 = sld [smem:[#allocation0]]
  $region38: #{tpu_custom_call.1} parent=0
    _
  %s8 = ssub.s32 1, %s6
  %s9 = scalar_select 0, %s8, %s6
  $region1: #{tpu_custom_call.1} parent=0
    #allocation2 [shape = 'u8[8192]{0}', space=vmem, size = 0x2000, scoped, tag = 'input window, operand 0, single buffered']
    #allocation3 [shape = 's32[1]{0}', space=sflag, size = 0x4, scoped, tag = 'scoped memory for tpu_custom_call.1']
    #allocation4 [shape = 's32[1]{0}', space=sflag, size = 0x4, scoped, tag = 'scoped memory for tpu_custom_call.1']
    #allocation5 [shape = 'u8[8192]{0}', space=vmem, size = 0x2000, scoped, tag = 'input window, operand 1, single buffered']
    #allocation6 [shape = 's32[1]{0}', space=sflag, size = 0x4, scoped, tag = 'scoped memory for tpu_custom_call.1']
    #allocation7 [shape = 'u8[8192]{0}', space=vmem, size = 0x2000, scoped, tag = 'output window, operand 0, single buffered']
    %10 = vsyncpa [#allocation3], 0
    %11 = vsyncpa [#allocation6], 0
    %12 = vsyncpa [#allocation4], 0
    // Predicated region
    $region2: #{tpu_custom_call.1} parent=1 // pred_check
      _
    $region3: #{tpu_custom_call.1} parent=1 // pred_check_branch
      %14 = sbr.rel (0) target = $region5
    $region4: #{tpu_custom_call.1} parent=1 // pred_region
      %s16 = ssub.s32 256, 256
      %17 = vsyncadd [#allocation3], %s16
      %s18 = sshll.u32 [#allocation2], 4
      %s19 = int_to_ptr.vmem [resolvable:$true] %s18
      %24 = dma.hbm_to_vmem [thread:$0]  %s0, 256, %s19, [#allocation3], 128, 128, 8
    $region5: #{tpu_custom_call.1} parent=1 // pred_fallthru
      _
    // Predicated region
    $region6: #{tpu_custom_call.1} parent=1 // pred_check
      _
    $region7: #{tpu_custom_call.1} parent=1 // pred_check_branch
      %26 = sbr.rel (0) target = $region9
    $region8: #{tpu_custom_call.1} parent=1 // pred_region
      %s28 = ssub.s32 256, 256
      %29 = vsyncadd [#allocation6], %s28
      %s30 = sshll.u32 [#allocation5], 4
      %s31 = int_to_ptr.vmem [resolvable:$true] %s30
      %36 = dma.hbm_to_vmem [thread:$0]  %s1, 256, %s31, [#allocation6], 64, 64, 4
    $region9: #{tpu_custom_call.1} parent=1 // pred_fallthru
      _
    // Predicated region
    $region10: #{tpu_custom_call.1} parent=1 // pred_check
      _
    $region11: #{tpu_custom_call.1} parent=1 // pred_check_branch
      %38 = sbr.rel (0) target = $region13
    $region12: #{tpu_custom_call.1} parent=1 // pred_region
      _
    $region13: #{tpu_custom_call.1} parent=1 // pred_fallthru
      _
    // Predicated region
    $region14: #{tpu_custom_call.1} parent=1 // pred_check
      _
    $region15: #{tpu_custom_call.1} parent=1 // pred_check_branch
      %40 = sbr.rel (0) target = $region17
    $region16: #{tpu_custom_call.1} parent=1 // pred_region
      _
    $region17: #{tpu_custom_call.1} parent=1 // pred_fallthru
      _
    // Predicated region
    $region18: #{tpu_custom_call.1} parent=1 // pred_check
      _
    $region19: #{tpu_custom_call.1} parent=1 // pred_check_branch
      %42 = sbr.rel (0) target = $region21
    $region20: #{tpu_custom_call.1} parent=1 // pred_region
      _
    $region21: #{tpu_custom_call.1} parent=1 // pred_fallthru
      _
    // Predicated region
    $region22: #{tpu_custom_call.1} parent=1 // pred_check
      _
    $region23: #{tpu_custom_call.1} parent=1 // pred_check_branch
      %44 = sbr.rel (0) target = $region25
    $region24: #{tpu_custom_call.1} parent=1 // pred_region
      %45 = dma.done [#allocation3], 256
    $region25: #{tpu_custom_call.1} parent=1 // pred_fallthru
      _
    // Predicated region
    $region26: #{tpu_custom_call.1} parent=1 // pred_check
      _
    $region27: #{tpu_custom_call.1} parent=1 // pred_check_branch
      %47 = sbr.rel (0) target = $region29
    $region28: #{tpu_custom_call.1} parent=1 // pred_region
      %48 = dma.done [#allocation6], 256
    $region29: #{tpu_custom_call.1} parent=1 // pred_fallthru
      _
    %v50 = vld [vmem:[#allocation2] sm:$0xff]
    %v51 = vld [vmem:[#allocation2 + $0x8] sm:$0xff]
    %v52 = vpack.c.bf16 %v51, %v50
    %v53 = vld [vmem:[#allocation5] sm:$0xf]
    %v54 = vld [vmem:[#allocation5 + $0x4] sm:$0xf]
    %v55 = vld [vmem:[#allocation5 + $0x8] sm:$0xf]
    %v56 = vld [vmem:[#allocation5 + $0xc] sm:$0xf]
    %v57 = vld [vmem:[%s2] sm:$0x1]
    %v59 = vlaneseq
    %v60 = vshrl.u32 %v59, 7
    %v61 = vsub.s32 0, %v60
    %v62 = vrot.slane %v57, %v61
    %v68 = vunpack.c.l.b16 %v53
    %v69 = vunpack.c.l.b16 %v54
    %v70 = vunpack.c.l.b16 %v55
    %v71 = vunpack.c.l.b16 %v56
    %v72 = vpack.c.b16 %v69, %v68
    %v73 = vpack.c.b16 %v71, %v70
    %vm76 = vcmask 261120
    %v78 = vsel %vm76, %v52, 0
    %80 = vmatprep.subr.bf16.mxu0 0
    %81 = vmatpush1.bf16.msra.mxu0 %v72
    %82 = vmatprep.subr.bf16.mxu0 0
    %83 = vmatpush1.bf16.msra.mxu0 %v73
    %84 = vmatprep.subr.bf16.mxu0 0
    %85 = vmatpush1.bf16.msra.mxu0 0
    %86 = vmatprep.subr.bf16.mxu0 0
    %87 = vmatpush1.bf16.msra.mxu0 0
    %88 = vmatprep.subr.bf16.mxu0 0
    %89 = vmatpush1.bf16.msra.mxu0 0
    %90 = vmatprep.subr.bf16.mxu0 0
    %91 = vmatpush1.bf16.msra.mxu0 0
    %92 = vmatprep.subr.bf16.mxu0 0
    %93 = vmatpush1.bf16.msra.mxu0 0
    %94 = vmatprep.subr.bf16.mxu0 0
    %95 = vmatpush1.bf16.msra.mxu0 0
    %96 = vmatprep.subr.bf16.mxu0 0
    %97 = vmatpush1.bf16.msra.mxu0 0
    %98 = vmatprep.subr.bf16.mxu0 0
    %99 = vmatpush1.bf16.msra.mxu0 0
    %100 = vmatprep.subr.bf16.mxu0 0
    %101 = vmatpush1.bf16.msra.mxu0 0
    %102 = vmatprep.subr.bf16.mxu0 0
    %103 = vmatpush1.bf16.msra.mxu0 0
    %104 = vmatprep.subr.bf16.mxu0 0
    %105 = vmatpush1.bf16.msra.mxu0 0
    %106 = vmatprep.subr.bf16.mxu0 0
    %107 = vmatpush1.bf16.msra.mxu0 0
    %108 = vmatprep.subr.bf16.mxu0 0
    %109 = vmatpush1.bf16.msra.mxu0 0
    %110 = vmatprep.subr.bf16.mxu0 0
    %111 = vmatpush1.bf16.msra.mxu0 0
    %112 = vmatprep.mubr.bf16.mxu0 0
    %113 = vmatmul.mubr.bf16.gmra.mrb[0].mxu0 %v78
    %v114 = vpop.f32.mrb[0].mxu0
    %v115 = vadd.f32 %v62, %v114
    %v116 = vpop.f32.mrb[0].mxu0
    %v117 = vpop.f32.mrb[0].mxu0
    %v118 = vadd.f32 %v62, %v117
    %v119 = vpop.f32.mrb[0].mxu0
    %120 = vdwg.mxu0
    %v121 = vsel %vm76, %v115, 0.0
    %122 = vadd.xlane.f32.xlu0 %v121
    %v123 = vpop.xlane.xlu0 %122
    %v124 = vsel %vm76, %v118, 0.0
    %125 = vadd.xlane.f32.xlu0 %v124
    %v126 = vpop.xlane.xlu0 %125
    %v127 = vmul.f32 %v115, %v115
    %v128 = vmul.f32 %v118, %v118
    %v129 = vsel %vm76, %v127, 0.0
    %130 = vadd.xlane.f32.xlu0 %v129
    %v131 = vpop.xlane.xlu0 %130
    %v132 = vsel %vm76, %v128, 0.0
    %133 = vadd.xlane.f32.xlu0 %v132
    %v134 = vpop.xlane.xlu0 %133
    %v135 = vmul.f32 %v123, 0.03125
    %v136 = vmul.f32 %v126, 0.03125
    %v137 = vmul.f32 %v123, %v135
    %v138 = vmul.f32 %v126, %v136
    %v139 = vsub.f32 %v131, %v137
    %v140 = vsub.f32 %v134, %v138
    %v141 = vmax.f32 %v139, 0.0
    %v142 = vmax.f32 %v140, 0.0
    %v143 = vmul.f32 %v141, 0.032258064
    %v144 = vmul.f32 %v142, 0.032258064
    %v145 = vrsqrt.pop %v143
    %v146 = vmul.f32 %v143, %v145
    %vm147 = vcmp.eq.f32.partialorder %v143, inf
    %v148 = vsel %vm147, %v143, %v146
    %vm149 = vcmp.eq.f32.partialorder %v143, 0.0
    %v150 = vand.u32 %v143, 2147483648
    %v151 = vsel %vm149, %v150, %v148
    %v152 = vrsqrt.pop %v144
    %v153 = vmul.f32 %v144, %v152
    %vm154 = vcmp.eq.f32.partialorder %v144, inf
    %v155 = vsel %vm154, %v144, %v153
    %vm156 = vcmp.eq.f32.partialorder %v144, 0.0
    %v157 = vand.u32 %v144, 2147483648
    %v158 = vsel %vm156, %v157, %v155
    %v159 = vadd.f32 %v151, 1e-06
    %v160 = vadd.f32 %v158, 1e-06
    %v161 = vrcp.pop %v159
    %v162 = vrcp.pop %v160
    %v163 = vld [vmem:[%s3] sm:$0x1]
    %v164 = vsub.f32 %v115, %v135
    %v165 = vsub.f32 %v118, %v136
    %v167 = vlaneseq
    %v168 = vshrl.u32 %v167, 7
    %v169 = vsub.s32 0, %v168
    %v170 = vrot.slane %v163, %v169
    %v172 = vmul.f32 %v170, %v164
    %v173 = vmul.f32 %v170, %v165
    %v174 = vmul.f32 %v172, %v161
    %v175 = vmul.f32 %v173, %v162
    %v176 = vld [vmem:[%s4] sm:$0x1]
    %v178 = vlaneseq
    %v179 = vshrl.u32 %v178, 7
    %v180 = vsub.s32 0, %v179
    %v181 = vrot.slane %v176, %v180
    %v183 = vadd.f32 %v174, %v181
    %v184 = vadd.f32 %v175, %v181
    %v185 = vadd.f32 %v50, %v183
    %v186 = vadd.f32 %v51, %v184
    %187 = vst.msk [vmem:[#allocation7] sm:$0xff] %vm76, %v185
    %188 = vst.msk [vmem:[#allocation7 + $0x8] sm:$0xff] %vm76, %v186
    // Predicated region
    $region30: #{tpu_custom_call.1} parent=1 // pred_check
      _
    $region31: #{tpu_custom_call.1} parent=1 // pred_check_branch
      %190 = sbr.rel (0) target = $region33
    $region32: #{tpu_custom_call.1} parent=1 // pred_region
      %s192 = ssub.s32 256, 256
      %193 = vsyncadd [#allocation4], %s192
      %s194 = sshll.u32 [#allocation7], 4
      %s195 = int_to_ptr.vmem [resolvable:$true] %s194
      %200 = dma.vmem_to_hbm [thread:$0]  %s195, 256, %s5, [#allocation4], 128, 128, 8
    $region33: #{tpu_custom_call.1} parent=1 // pred_fallthru
      _
    // Predicated region
    $region34: #{tpu_custom_call.1} parent=1 // pred_check
      _
    $region35: #{tpu_custom_call.1} parent=1 // pred_check_branch
      %202 = sbr.rel (0) target = $region37
    $region36: #{tpu_custom_call.1} parent=1 // pred_region
      %203 = dma.done [#allocation4], 256
    $region37: #{tpu_custom_call.1} parent=1 // pred_fallthru
      _
    %204 = vsyncpa [#allocation3], 1
    %205 = vsyncpa [#allocation6], 1
    %206 = vsyncpa [#allocation4], 1

// kernel: tpu_custom_call.1
$region0: #{tpu_custom_call.1}
  #allocation0 [shape = 'u32[]', space=smem, size = 0x4, offset = 0x4, fixed_abs, tag = 'smem constant byte address 0x4 - core index']
  #allocation1 [shape = 'u32[144,128]{1,0:T(1,128)}', space=vmem, size = 0x12000, scoped, tag = 'internal scratch']
  %s0 = inlined_call_operand.hbm [shape: f32[16,32], index: 0, kind: input, shape index: {}]
  %s1 = inlined_call_operand.hbm [shape: bf16[32,32], index: 1, kind: input, shape index: {}]
  %s2 = inlined_call_operand.vmem [shape: f32[1,32], index: 2, kind: input, shape index: {}]
  %s3 = inlined_call_operand.vmem [shape: f32[1,32], index: 3, kind: input, shape index: {}]
  %s4 = inlined_call_operand.vmem [shape: f32[1,32], index: 4, kind: input, shape index: {}]
  %s5 = inlined_call_operand.hbm [shape: f32[16,32], index: 5, kind: output, shape index: {}]
  %s6 = sld [smem:[#allocation0]]
  $region38: #{tpu_custom_call.1} parent=0
    _
  %s8 = ssub.s32 1, %s6
  %s9 = scalar_select 0, %s8, %s6
  $region1: #{tpu_custom_call.1} parent=0
    #allocation2 [shape = 'u8[8192]{0}', space=vmem, size = 0x2000, scoped, tag = 'input window, operand 0, single buffered']
    #allocation3 [shape = 's32[1]{0}', space=sflag, size = 0x4, scoped, tag = 'scoped memory for tpu_custom_call.1']
    #allocation4 [shape = 's32[1]{0}', space=sflag, size = 0x4, scoped, tag = 'scoped memory for tpu_custom_call.1']
    #allocation5 [shape = 'u8[8192]{0}', space=vmem, size = 0x2000, scoped, tag = 'input window, operand 1, single buffered']
    #allocation6 [shape = 's32[1]{0}', space=sflag, size = 0x4, scoped, tag = 'scoped memory for tpu_custom_call.1']
    #allocation7 [shape = 'u8[8192]{0}', space=vmem, size = 0x2000, scoped, tag = 'output window, operand 0, single buffered']
    %10 = vsyncpa [#allocation3], 0
    %11 = vsyncpa [#allocation6], 0
    %12 = vsyncpa [#allocation4], 0
    // Predicated region
    $region2: #{tpu_custom_call.1} parent=1 // pred_check
      _
    $region3: #{tpu_custom_call.1} parent=1 // pred_check_branch
      %14 = sbr.rel (0) target = $region5
    $region4: #{tpu_custom_call.1} parent=1 // pred_region
      %s16 = ssub.s32 256, 256
      %17 = vsyncadd [#allocation3], %s16
      %s18 = sshll.u32 [#allocation2], 4
      %s19 = int_to_ptr.vmem [resolvable:$true] %s18
      %24 = dma.hbm_to_vmem [thread:$0]  %s0, 256, %s19, [#allocation3], 128, 128, 8
    $region5: #{tpu_custom_call.1} parent=1 // pred_fallthru
      _
    // Predicated region
    $region6: #{tpu_custom_call.1} parent=1 // pred_check
      _
    $region7: #{tpu_custom_call.1} parent=1 // pred_check_branch
      %26 = sbr.rel (0) target = $region9
    $region8: #{tpu_custom_call.1} parent=1 // pred_region
      %s28 = ssub.s32 256, 256
      %29 = vsyncadd [#allocation6], %s28
      %s30 = sshll.u32 [#allocation5], 4
      %s31 = int_to_ptr.vmem [resolvable:$true] %s30
      %36 = dma.hbm_to_vmem [thread:$0]  %s1, 256, %s31, [#allocation6], 64, 64, 4
    $region9: #{tpu_custom_call.1} parent=1 // pred_fallthru
      _
    // Predicated region
    $region10: #{tpu_custom_call.1} parent=1 // pred_check
      _
    $region11: #{tpu_custom_call.1} parent=1 // pred_check_branch
      %38 = sbr.rel (0) target = $region13
    $region12: #{tpu_custom_call.1} parent=1 // pred_region
      _
    $region13: #{tpu_custom_call.1} parent=1 // pred_fallthru
      _
    // Predicated region
    $region14: #{tpu_custom_call.1} parent=1 // pred_check
      _
    $region15: #{tpu_custom_call.1} parent=1 // pred_check_branch
      %40 = sbr.rel (0) target = $region17
    $region16: #{tpu_custom_call.1} parent=1 // pred_region
      _
    $region17: #{tpu_custom_call.1} parent=1 // pred_fallthru
      _
    // Predicated region
    $region18: #{tpu_custom_call.1} parent=1 // pred_check
      _
    $region19: #{tpu_custom_call.1} parent=1 // pred_check_branch
      %42 = sbr.rel (0) target = $region21
    $region20: #{tpu_custom_call.1} parent=1 // pred_region
      _
    $region21: #{tpu_custom_call.1} parent=1 // pred_fallthru
      _
    // Predicated region
    $region22: #{tpu_custom_call.1} parent=1 // pred_check
      _
    $region23: #{tpu_custom_call.1} parent=1 // pred_check_branch
      %44 = sbr.rel (0) target = $region25
    $region24: #{tpu_custom_call.1} parent=1 // pred_region
      %45 = dma.done [#allocation3], 256
    $region25: #{tpu_custom_call.1} parent=1 // pred_fallthru
      _
    // Predicated region
    $region26: #{tpu_custom_call.1} parent=1 // pred_check
      _
    $region27: #{tpu_custom_call.1} parent=1 // pred_check_branch
      %47 = sbr.rel (0) target = $region29
    $region28: #{tpu_custom_call.1} parent=1 // pred_region
      %48 = dma.done [#allocation6], 256
    $region29: #{tpu_custom_call.1} parent=1 // pred_fallthru
      _
    %v50 = vld [vmem:[#allocation2] sm:$0xff]
    %v51 = vld [vmem:[#allocation2 + $0x8] sm:$0xff]
    %v52 = vpack.c.bf16 %v51, %v50
    %v53 = vld [vmem:[#allocation5] sm:$0xf]
    %v54 = vld [vmem:[#allocation5 + $0x4] sm:$0xf]
    %v55 = vld [vmem:[#allocation5 + $0x8] sm:$0xf]
    %v56 = vld [vmem:[#allocation5 + $0xc] sm:$0xf]
    %v57 = vld [vmem:[%s2] sm:$0x1]
    %v59 = vlaneseq
    %v60 = vshrl.u32 %v59, 7
    %v61 = vsub.s32 0, %v60
    %v62 = vrot.slane %v57, %v61
    %v68 = vunpack.c.l.b16 %v53
    %v69 = vunpack.c.l.b16 %v54
    %v70 = vunpack.c.l.b16 %v55
    %v71 = vunpack.c.l.b16 %v56
    %v72 = vpack.c.b16 %v69, %v68
    %v73 = vpack.c.b16 %v71, %v70
    %vm76 = vcmask 261120
    %v78 = vsel %vm76, %v52, 0
    %80 = vmatprep.subr.bf16.mxu0 0
    %81 = vmatpush1.bf16.msra.mxu0 %v72
    %82 = vmatprep.subr.bf16.mxu0 0
    %83 = vmatpush1.bf16.msra.mxu0 %v73
    %84 = vmatprep.subr.bf16.mxu0 0
    %85 = vmatpush1.bf16.msra.mxu0 0
    %86 = vmatprep.subr.bf16.mxu0 0
    %87 = vmatpush1.bf16.msra.mxu0 0
    %88 = vmatprep.subr.bf16.mxu0 0
    %89 = vmatpush1.bf16.msra.mxu0 0
    %90 = vmatprep.subr.bf16.mxu0 0
    %91 = vmatpush1.bf16.msra.mxu0 0
    %92 = vmatprep.subr.bf16.mxu0 0
    %93 = vmatpush1.bf16.msra.mxu0 0
    %94 = vmatprep.subr.bf16.mxu0 0
    %95 = vmatpush1.bf16.msra.mxu0 0
    %96 = vmatprep.subr.bf16.mxu0 0
    %97 = vmatpush1.bf16.msra.mxu0 0
    %98 = vmatprep.subr.bf16.mxu0 0
    %99 = vmatpush1.bf16.msra.mxu0 0
    %100 = vmatprep.subr.bf16.mxu0 0
    %101 = vmatpush1.bf16.msra.mxu0 0
    %102 = vmatprep.subr.bf16.mxu0 0
    %103 = vmatpush1.bf16.msra.mxu0 0
    %104 = vmatprep.subr.bf16.mxu0 0
    %105 = vmatpush1.bf16.msra.mxu0 0
    %106 = vmatprep.subr.bf16.mxu0 0
    %107 = vmatpush1.bf16.msra.mxu0 0
    %108 = vmatprep.subr.bf16.mxu0 0
    %109 = vmatpush1.bf16.msra.mxu0 0
    %110 = vmatprep.subr.bf16.mxu0 0
    %111 = vmatpush1.bf16.msra.mxu0 0
    %112 = vmatprep.mubr.bf16.mxu0 0
    %113 = vmatmul.mubr.bf16.gmra.mrb[0].mxu0 %v78
    %v114 = vpop.f32.mrb[0].mxu0
    %v115 = vadd.f32 %v62, %v114
    %v116 = vpop.f32.mrb[0].mxu0
    %v117 = vpop.f32.mrb[0].mxu0
    %v118 = vadd.f32 %v62, %v117
    %v119 = vpop.f32.mrb[0].mxu0
    %120 = vdwg.mxu0
    %v121 = vsel %vm76, %v115, 0.0
    %122 = vadd.xlane.f32.xlu0 %v121
    %v123 = vpop.xlane.xlu0 %122
    %v124 = vsel %vm76, %v118, 0.0
    %125 = vadd.xlane.f32.xlu0 %v124
    %v126 = vpop.xlane.xlu0 %125
    %v127 = vmul.f32 %v115, %v115
    %v128 = vmul.f32 %v118, %v118
    %v129 = vsel %vm76, %v127, 0.0
    %130 = vadd.xlane.f32.xlu0 %v129
    %v131 = vpop.xlane.xlu0 %130
    %v132 = vsel %vm76, %v128, 0.0
    %133 = vadd.xlane.f32.xlu0 %v132
    %v134 = vpop.xlane.xlu0 %133
    %v135 = vmul.f32 %v123, 0.03125
    %v136 = vmul.f32 %v126, 0.03125
    %v137 = vmul.f32 %v123, %v135
    %v138 = vmul.f32 %v126, %v136
    %v139 = vsub.f32 %v131, %v137
    %v140 = vsub.f32 %v134, %v138
    %v141 = vmax.f32 %v139, 0.0
    %v142 = vmax.f32 %v140, 0.0
    %v143 = vmul.f32 %v141, 0.032258064
    %v144 = vmul.f32 %v142, 0.032258064
    %v145 = vrsqrt.pop %v143
    %v146 = vmul.f32 %v143, %v145
    %vm147 = vcmp.eq.f32.partialorder %v143, inf
    %v148 = vsel %vm147, %v143, %v146
    %vm149 = vcmp.eq.f32.partialorder %v143, 0.0
    %v150 = vand.u32 %v143, 2147483648
    %v151 = vsel %vm149, %v150, %v148
    %v152 = vrsqrt.pop %v144
    %v153 = vmul.f32 %v144, %v152
    %vm154 = vcmp.eq.f32.partialorder %v144, inf
    %v155 = vsel %vm154, %v144, %v153
    %vm156 = vcmp.eq.f32.partialorder %v144, 0.0
    %v157 = vand.u32 %v144, 2147483648
    %v158 = vsel %vm156, %v157, %v155
    %v159 = vadd.f32 %v151, 1e-06
    %v160 = vadd.f32 %v158, 1e-06
    %v161 = vrcp.pop %v159
    %v162 = vrcp.pop %v160
    %v163 = vld [vmem:[%s3] sm:$0x1]
    %v164 = vsub.f32 %v115, %v135
    %v165 = vsub.f32 %v118, %v136
    %v167 = vlaneseq
    %v168 = vshrl.u32 %v167, 7
    %v169 = vsub.s32 0, %v168
    %v170 = vrot.slane %v163, %v169
    %v172 = vmul.f32 %v170, %v164
    %v173 = vmul.f32 %v170, %v165
    %v174 = vmul.f32 %v172, %v161
    %v175 = vmul.f32 %v173, %v162
    %v176 = vld [vmem:[%s4] sm:$0x1]
    %v178 = vlaneseq
    %v179 = vshrl.u32 %v178, 7
    %v180 = vsub.s32 0, %v179
    %v181 = vrot.slane %v176, %v180
    %v183 = vadd.f32 %v174, %v181
    %v184 = vadd.f32 %v175, %v181
    %v185 = vadd.f32 %v50, %v183
    %v186 = vadd.f32 %v51, %v184
    %187 = vst.msk [vmem:[#allocation7] sm:$0xff] %vm76, %v185
    %188 = vst.msk [vmem:[#allocation7 + $0x8] sm:$0xff] %vm76, %v186
    // Predicated region
    $region30: #{tpu_custom_call.1} parent=1 // pred_check
      _
    $region31: #{tpu_custom_call.1} parent=1 // pred_check_branch
      %190 = sbr.rel (0) target = $region33
    $region32: #{tpu_custom_call.1} parent=1 // pred_region
      %s192 = ssub.s32 256, 256
      %193 = vsyncadd [#allocation4], %s192
      %s194 = sshll.u32 [#allocation7], 4
      %s195 = int_to_ptr.vmem [resolvable:$true] %s194
      %200 = dma.vmem_to_hbm [thread:$0]  %s195, 256, %s5, [#allocation4], 128, 128, 8
    $region33: #{tpu_custom_call.1} parent=1 // pred_fallthru
      _
    // Predicated region
    $region34: #{tpu_custom_call.1} parent=1 // pred_check
      _
    $region35: #{tpu_custom_call.1} parent=1 // pred_check_branch
      %202 = sbr.rel (0) target = $region37
    $region36: #{tpu_custom_call.1} parent=1 // pred_region
      %203 = dma.done [#allocation4], 256
    $region37: #{tpu_custom_call.1} parent=1 // pred_fallthru
      _
    %204 = vsyncpa [#allocation3], 1
    %205 = vsyncpa [#allocation6], 1
    %206 = vsyncpa [#allocation4], 1

</llo_original>
